<compile_context>
chip_gen: v5e
topology: v5e:2x2
jax: 0.10.0
libtpu: 0.0.40
codegen_flags: <defaults>
</compile_context>

<pallas_src>
import functools

import jax
import jax.numpy as jnp
from jax.experimental import pallas as pl
from jax.experimental.pallas import tpu as pltpu

_LANE = 128
_SUBLANE_F32 = 8
_SUBLANE_BF16 = 16


def _round_up(x, m):
    return ((x + m - 1) // m) * m


def _cls_head_kernel(x_ref, w1_ref, b1_ref, w2_ref, b2_ref, o_ref, *,
                     mxu_dtype, n_chunks, rows):
    # x_ref : [TB, H]   CLS-token features (native activation dtype)
    # w1_ref: [H, H]    dense weight   (in, out), MXU dtype (bf16)
    # b1_ref: [1, H]    dense bias, f32
    # w2_ref: [H, LP]   out_proj weight (in, out), lane-padded, MXU dtype
    # b2_ref: [1, LP]   out_proj bias, f32, zero-padded
    # o_ref : [TB, LP]  logits, lane-padded
    w1 = w1_ref[...]
    b1 = b1_ref[...]
    w2 = w2_ref[...]
    b2 = b2_ref[...]
    # Static row chunks (fully unrolled, static pl.ds starts -> zero-cost
    # slicing): matmul of chunk c+1 (MXU slot) overlaps the bias/tanh
    # epilogue of chunk c (VPU/EUP slots).
    for c in range(n_chunks):
        r0 = c * rows
        x = x_ref[pl.ds(r0, rows), :].astype(mxu_dtype)
        h = jnp.dot(x, w1, preferred_element_type=jnp.float32) + b1
        # tanh in MXU dtype: bf16 EUP path on v6e/v7x, feeds bf16 matmul 2.
        h = jnp.tanh(h.astype(mxu_dtype))
        out = jnp.dot(h, w2, preferred_element_type=jnp.float32) + b2
        o_ref[pl.ds(r0, rows), :] = out.astype(o_ref.dtype)


def prepare_head_params(w_dense, b_dense, w_out, b_out, *,
                        mxu_dtype=jnp.bfloat16):
    """One-time (model-load) weight prep: bf16 cast + lane padding.

    Hoisted out of the per-call path so each forward skips the O(H^2)
    cast/pad traffic. Weights are stored [in, out] (transposed from PyTorch).
    """
    H = w_dense.shape[0]
    L = w_out.shape[1]
    LP = _round_up(L, _LANE)                       # lane-dense output width
    return {
        "w1": w_dense.astype(mxu_dtype),                            # [H, H]
        "b1": b_dense.reshape(1, H).astype(jnp.float32),            # [1, H]
        "w2": jnp.pad(w_out, ((0, 0), (0, LP - L))).astype(mxu_dtype),
        "b2": jnp.pad(b_out, (0, LP - L)).reshape(1, LP).astype(jnp.float32),
        "num_labels": L,
        "mxu_dtype": mxu_dtype,
    }


def roberta_classification_head(features, params, *, block_b=1024,
                                out_dtype=jnp.float32):
    """features: [B, S, H]; params from prepare_head_params; returns [B, L]."""
    B, S, H = features.shape
    L = params["num_labels"]
    mxu_dtype = params["mxu_dtype"]
    w1, b1, w2, b2 = params["w1"], params["b1"], params["w2"], params["b2"]
    LP = w2.shape[1]

    x_itemsize = jnp.dtype(features.dtype).itemsize
    sub = _SUBLANE_BF16 if x_itemsize == 2 else _SUBLANE_F32

    # Batch tile: big enough to amortize per-step overhead, small enough that
    # the grid has >= 2 blocks whenever B allows (both v7x TCs get work).
    if B > sub:
        tb = min(_round_up(min(block_b, B), sub),
                 _round_up(pl.cdiv(B, 2), sub))
    else:
        tb = sub
    num_blocks = pl.cdiv(B, tb)        # ragged tail clipped on writeback

    # In-kernel row chunks so MXU and tanh epilogue co-issue across chunks.
    n_chunks = 1
    for c in (4, 2):
        if tb % (c * sub) == 0:
            n_chunks = c
            break
    rows = tb // n_chunks

    # CLS-token slice via BlockSpec: reshape [B,S,H] -> [B,S*H] (free for a
    # contiguous array) and read the (tb, H) block at column 0.  Requires the
    # lane dim H to be 128-aligned (true for real RoBERTa H=768/1024);
    # otherwise fall back to an XLA strided slice of the CLS token.
    if S == 1 or H % _LANE == 0:
        x_in = features.reshape(B, S * H)
    else:
        x_in = features[:, 0, :]
    x_spec = pl.BlockSpec((tb, H), lambda i: (i, 0))
    out_spec = pl.BlockSpec((tb, LP), lambda i: (i, 0))

    mxu_itemsize = jnp.dtype(mxu_dtype).itemsize
    out_itemsize = jnp.dtype(out_dtype).itemsize

    kernel = functools.partial(_cls_head_kernel, mxu_dtype=mxu_dtype,
                               n_chunks=n_chunks, rows=rows)

    def run(single_buffer_weights):
        if single_buffer_weights:
            const_kw = dict(pipeline_mode=pl.Buffered(1))   # never re-fetched
            n_bufs = 1
        else:
            const_kw = {}
            n_bufs = 2
        # VMEM budget: double-buffered x/out tiles + resident weights + f32
        # intermediates per chunk; capped at 48 MiB (headroom in v7x 64 MiB).
        est = (2 * tb * H * x_itemsize                    # x tiles
               + 2 * tb * LP * out_itemsize               # output tiles
               + n_bufs * (H * H + H * LP) * mxu_itemsize # weights
               + n_bufs * (H + LP) * 4                    # biases
               + rows * (H + LP) * 4                      # f32 h / pre-cast out
               + 2 * rows * H * mxu_itemsize)             # bf16 x / h chunk
        vmem_limit = int(min(max(est + (4 << 20), 16 << 20), 48 << 20))
        return pl.pallas_call(
            kernel,
            out_shape=jax.ShapeDtypeStruct((B, LP), out_dtype),
            grid=(num_blocks,),
            in_specs=[
                x_spec,                                            # tiled x
                pl.BlockSpec((H, H), lambda i: (0, 0), **const_kw),   # W1
                pl.BlockSpec((1, H), lambda i: (0, 0), **const_kw),   # b1
                pl.BlockSpec((H, LP), lambda i: (0, 0), **const_kw),  # W2
                pl.BlockSpec((1, LP), lambda i: (0, 0), **const_kw),  # b2
            ],
            out_specs=out_spec,
            compiler_params=pltpu.CompilerParams(
                dimension_semantics=("parallel",),
                vmem_limit_bytes=vmem_limit),
        )(x_in, w1, b1, w2, b2)

    if hasattr(pl, "Buffered"):
        try:
            # block inside the try so any failure of the single-buffered
            # variant (unsupported pipeline_mode on this build) is caught.
            out_padded = jax.block_until_ready(run(True))
        except Exception:                                  # noqa: BLE001
            out_padded = run(False)
    else:
        out_padded = run(False)

    return out_padded[:, :L]


def _reference(features, params, out_dtype=jnp.float32):
    """Pure-JAX reference matching the kernel's inference precision."""
    mxu = params["mxu_dtype"]
    L = params["num_labels"]
    x = features[:, 0, :].astype(mxu)
    h = jnp.dot(x, params["w1"], preferred_element_type=jnp.float32) + params["b1"]
    h = jnp.tanh(h.astype(mxu))
    out = jnp.dot(h, params["w2"], preferred_element_type=jnp.float32) + params["b2"]
    return out[:, :L].astype(out_dtype)


if __name__ == "__main__":
    # Small config consistent with the module: hidden_size=128, num_labels=4.
    H, L = 128, 4

    key = jax.random.PRNGKey(0)
    k_w1, k_b1, k_w2, k_b2, k_f1, k_f2, k_f3, k_f4 = jax.random.split(key, 8)

    # Weights stored as [in, out] (already transposed from PyTorch's [out, in]).
    w_dense = jax.random.normal(k_w1, (H, H), dtype=jnp.float32) * 0.02
    b_dense = jax.random.normal(k_b1, (H,), dtype=jnp.float32) * 0.02
    w_out = jax.random.normal(k_w2, (H, L), dtype=jnp.float32) * 0.02
    b_out = jax.random.normal(k_b2, (L,), dtype=jnp.float32) * 0.02

    # One-time weight prep (model-load), reused across all forwards below.
    params = prepare_head_params(w_dense, b_dense, w_out, b_out)

    cases = [
        (k_f1, 8, 8, jnp.float32),    # single block
        (k_f2, 2, 8, jnp.float32),    # ragged tail block
        (k_f3, 256, 8, jnp.float32),  # multi-block + in-kernel row chunking
        (k_f4, 32, 8, jnp.bfloat16),  # bf16 activations, 16-row sublane tiles
    ]
    for kf, B, S, dt in cases:
        features = jax.random.normal(kf, (B, S, H), dtype=jnp.float32).astype(dt)
        logits = roberta_classification_head(features, params)
        logits = jax.block_until_ready(logits)
        ref = _reference(features, params)
        assert logits.shape == (B, L), f"bad shape for B={B}"
        assert jnp.allclose(logits, ref, atol=1e-2, rtol=1e-2), (
            f"mismatch vs reference for B={B}, dtype={dt}")

    print("KERNEL_OK")
</pallas_src>

<mosaic_0001>
module attributes {stable_mosaic.version = 11 : i64} {
  func.func @_cls_head_kernel(%arg0: i32, %arg1: memref<8x128xf32, #tpu.memory_space<vmem>>, %arg2: memref<128x128xbf16, #tpu.memory_space<vmem>>, %arg3: memref<1x128xf32, #tpu.memory_space<vmem>>, %arg4: memref<128x128xbf16, #tpu.memory_space<vmem>>, %arg5: memref<1x128xf32, #tpu.memory_space<vmem>>, %arg6: memref<8x128xf32, #tpu.memory_space<vmem>>) attributes {dimension_semantics = [#tpu.dimension_semantics<parallel>], iteration_bounds = array<i64: 1>, scalar_prefetch = 0 : i64, scratch_operands = 0 : i64, tpu.core_type = #tpu.core_type<tc>, window_params = [{transform_indices = @transform_0, window_bounds = array<i64: 8, 128>}, {pipeline_mode = #tpu.pipeline_mode<synchronous>, transform_indices = @transform_1, window_bounds = array<i64: 128, 128>}, {pipeline_mode = #tpu.pipeline_mode<synchronous>, transform_indices = @transform_2, window_bounds = array<i64: 1, 128>}, {pipeline_mode = #tpu.pipeline_mode<synchronous>, transform_indices = @transform_3, window_bounds = array<i64: 128, 128>}, {pipeline_mode = #tpu.pipeline_mode<synchronous>, transform_indices = @transform_4, window_bounds = array<i64: 1, 128>}, {transform_indices = @transform_5, window_bounds = array<i64: 8, 128>}]} {
    %c0 = arith.constant 0 : index
    %c0_0 = arith.constant 0 : index
    %0 = vector.load %arg2[%c0, %c0_0] : memref<128x128xbf16, #tpu.memory_space<vmem>>, vector<128x128xbf16>
    %c0_1 = arith.constant 0 : index
    %c0_2 = arith.constant 0 : index
    %1 = vector.load %arg3[%c0_1, %c0_2] : memref<1x128xf32, #tpu.memory_space<vmem>>, vector<1x128xf32>
    %c0_3 = arith.constant 0 : index
    %c0_4 = arith.constant 0 : index
    %2 = vector.load %arg4[%c0_3, %c0_4] : memref<128x128xbf16, #tpu.memory_space<vmem>>, vector<128x128xbf16>
    %c0_5 = arith.constant 0 : index
    %c0_6 = arith.constant 0 : index
    %3 = vector.load %arg5[%c0_5, %c0_6] : memref<1x128xf32, #tpu.memory_space<vmem>>, vector<1x128xf32>
    %c0_7 = arith.constant 0 : index
    %c0_8 = arith.constant 0 : index
    %4 = vector.load %arg1[%c0_7, %c0_8] : memref<8x128xf32, #tpu.memory_space<vmem>>, vector<8x128xf32>
    %5 = arith.truncf %4 : vector<8x128xf32> to vector<8x128xbf16>
    %cst = arith.constant dense<0.000000e+00> : vector<8x128xf32>
    %6 = tpu.matmul %5, %0, %cst {dimension_numbers = #tpu.dot_dimension_numbers<[1], [0], [0], [1], [0, 0, 1, 1], [], []>} : vector<8x128xbf16>, vector<128x128xbf16>, vector<8x128xf32> -> vector<8x128xf32>
    %7 = vector.broadcast %1 : vector<1x128xf32> to vector<8x128xf32>
    %8 = arith.addf %6, %7 : vector<8x128xf32>
    %9 = arith.truncf %8 : vector<8x128xf32> to vector<8x128xbf16>
    %10 = math.tanh %9 : vector<8x128xbf16>
    %cst_9 = arith.constant dense<0.000000e+00> : vector<8x128xf32>
    %11 = tpu.matmul %10, %2, %cst_9 {dimension_numbers = #tpu.dot_dimension_numbers<[1], [0], [0], [1], [0, 0, 1, 1], [], []>} : vector<8x128xbf16>, vector<128x128xbf16>, vector<8x128xf32> -> vector<8x128xf32>
    %12 = vector.broadcast %3 : vector<1x128xf32> to vector<8x128xf32>
    %13 = arith.addf %11, %12 : vector<8x128xf32>
    %c0_10 = arith.constant 0 : index
    %c0_11 = arith.constant 0 : index
    %14 = vector.load %arg6[%c0_10, %c0_11] : memref<8x128xf32, #tpu.memory_space<vmem>>, vector<8x128xf32>
    tpu.vector_store %arg6[%c0_10, %c0_11], %13 {strides = array<i32>} : memref<8x128xf32, #tpu.memory_space<vmem>>, vector<8x128xf32>,
    return
  }
  func.func @transform_0(%arg0: i32) -> (i32, i32) {
    %c0_i32 = arith.constant 0 : i32
    %c0_i32_0 = arith.constant 0 : i32
    return %arg0, %c0_i32 : i32, i32
  }
  func.func @transform_1(%arg0: i32) -> (i32, i32) {
    %c0_i32 = arith.constant 0 : i32
    %c0_i32_0 = arith.constant 0 : i32
    %c0_i32_1 = arith.constant 0 : i32
    return %c0_i32, %c0_i32_0 : i32, i32
  }
  func.func @transform_2(%arg0: i32) -> (i32, i32) {
    %c0_i32 = arith.constant 0 : i32
    %c0_i32_0 = arith.constant 0 : i32
    %c0_i32_1 = arith.constant 0 : i32
    return %c0_i32, %c0_i32_0 : i32, i32
  }
  func.func @transform_3(%arg0: i32) -> (i32, i32) {
    %c0_i32 = arith.constant 0 : i32
    %c0_i32_0 = arith.constant 0 : i32
    %c0_i32_1 = arith.constant 0 : i32
    return %c0_i32, %c0_i32_0 : i32, i32
  }
  func.func @transform_4(%arg0: i32) -> (i32, i32) {
    %c0_i32 = arith.constant 0 : i32
    %c0_i32_0 = arith.constant 0 : i32
    %c0_i32_1 = arith.constant 0 : i32
    return %c0_i32, %c0_i32_0 : i32, i32
  }
  func.func @transform_5(%arg0: i32) -> (i32, i32) {
    %c0_i32 = arith.constant 0 : i32
    %c0_i32_0 = arith.constant 0 : i32
    return %arg0, %c0_i32 : i32, i32
  }
}

module attributes {stable_mosaic.version = 11 : i64} {
  func.func @_cls_head_kernel(%arg0: i32, %arg1: memref<8x128xf32, #tpu.memory_space<vmem>>, %arg2: memref<128x128xbf16, #tpu.memory_space<vmem>>, %arg3: memref<1x128xf32, #tpu.memory_space<vmem>>, %arg4: memref<128x128xbf16, #tpu.memory_space<vmem>>, %arg5: memref<1x128xf32, #tpu.memory_space<vmem>>, %arg6: memref<8x128xf32, #tpu.memory_space<vmem>>) attributes {dimension_semantics = [#tpu.dimension_semantics<parallel>], iteration_bounds = array<i64: 1>, scalar_prefetch = 0 : i64, scratch_operands = 0 : i64, tpu.core_type = #tpu.core_type<tc>, window_params = [{transform_indices = @transform_0, window_bounds = array<i64: 8, 128>}, {pipeline_mode = #tpu.pipeline_mode<synchronous>, transform_indices = @transform_1, window_bounds = array<i64: 128, 128>}, {pipeline_mode = #tpu.pipeline_mode<synchronous>, transform_indices = @transform_2, window_bounds = array<i64: 1, 128>}, {pipeline_mode = #tpu.pipeline_mode<synchronous>, transform_indices = @transform_3, window_bounds = array<i64: 128, 128>}, {pipeline_mode = #tpu.pipeline_mode<synchronous>, transform_indices = @transform_4, window_bounds = array<i64: 1, 128>}, {transform_indices = @transform_5, window_bounds = array<i64: 8, 128>}]} {
    %c0 = arith.constant 0 : index
    %c0_0 = arith.constant 0 : index
    %0 = vector.load %arg2[%c0, %c0_0] : memref<128x128xbf16, #tpu.memory_space<vmem>>, vector<128x128xbf16>
    %c0_1 = arith.constant 0 : index
    %c0_2 = arith.constant 0 : index
    %1 = vector.load %arg3[%c0_1, %c0_2] : memref<1x128xf32, #tpu.memory_space<vmem>>, vector<1x128xf32>
    %c0_3 = arith.constant 0 : index
    %c0_4 = arith.constant 0 : index
    %2 = vector.load %arg4[%c0_3, %c0_4] : memref<128x128xbf16, #tpu.memory_space<vmem>>, vector<128x128xbf16>
    %c0_5 = arith.constant 0 : index
    %c0_6 = arith.constant 0 : index
    %3 = vector.load %arg5[%c0_5, %c0_6] : memref<1x128xf32, #tpu.memory_space<vmem>>, vector<1x128xf32>
    %c0_7 = arith.constant 0 : index
    %c0_8 = arith.constant 0 : index
    %4 = vector.load %arg1[%c0_7, %c0_8] : memref<8x128xf32, #tpu.memory_space<vmem>>, vector<8x128xf32>
    %5 = arith.truncf %4 : vector<8x128xf32> to vector<8x128xbf16>
    %cst = arith.constant dense<0.000000e+00> : vector<8x128xf32>
    %6 = tpu.matmul %5, %0, %cst {dimension_numbers = #tpu.dot_dimension_numbers<[1], [0], [0], [1], [0, 0, 1, 1], [], []>} : vector<8x128xbf16>, vector<128x128xbf16>, vector<8x128xf32> -> vector<8x128xf32>
    %7 = vector.broadcast %1 : vector<1x128xf32> to vector<8x128xf32>
    %8 = arith.addf %6, %7 : vector<8x128xf32>
    %9 = arith.truncf %8 : vector<8x128xf32> to vector<8x128xbf16>
    %10 = math.tanh %9 : vector<8x128xbf16>
    %cst_9 = arith.constant dense<0.000000e+00> : vector<8x128xf32>
    %11 = tpu.matmul %10, %2, %cst_9 {dimension_numbers = #tpu.dot_dimension_numbers<[1], [0], [0], [1], [0, 0, 1, 1], [], []>} : vector<8x128xbf16>, vector<128x128xbf16>, vector<8x128xf32> -> vector<8x128xf32>
    %12 = vector.broadcast %3 : vector<1x128xf32> to vector<8x128xf32>
    %13 = arith.addf %11, %12 : vector<8x128xf32>
    %c0_10 = arith.constant 0 : index
    %c0_11 = arith.constant 0 : index
    %14 = vector.load %arg6[%c0_10, %c0_11] : memref<8x128xf32, #tpu.memory_space<vmem>>, vector<8x128xf32>
    tpu.vector_store %arg6[%c0_10, %c0_11], %13 {strides = array<i32>} : memref<8x128xf32, #tpu.memory_space<vmem>>, vector<8x128xf32>,
    return
  }
  func.func @transform_0(%arg0: i32) -> (i32, i32) {
    %c0_i32 = arith.constant 0 : i32
    %c0_i32_0 = arith.constant 0 : i32
    return %arg0, %c0_i32 : i32, i32
  }
  func.func @transform_1(%arg0: i32) -> (i32, i32) {
    %c0_i32 = arith.constant 0 : i32
    %c0_i32_0 = arith.constant 0 : i32
    %c0_i32_1 = arith.constant 0 : i32
    return %c0_i32, %c0_i32_0 : i32, i32
  }
  func.func @transform_2(%arg0: i32) -> (i32, i32) {
    %c0_i32 = arith.constant 0 : i32
    %c0_i32_0 = arith.constant 0 : i32
    %c0_i32_1 = arith.constant 0 : i32
    return %c0_i32, %c0_i32_0 : i32, i32
  }
  func.func @transform_3(%arg0: i32) -> (i32, i32) {
    %c0_i32 = arith.constant 0 : i32
    %c0_i32_0 = arith.constant 0 : i32
    %c0_i32_1 = arith.constant 0 : i32
    return %c0_i32, %c0_i32_0 : i32, i32
  }
  func.func @transform_4(%arg0: i32) -> (i32, i32) {
    %c0_i32 = arith.constant 0 : i32
    %c0_i32_0 = arith.constant 0 : i32
    %c0_i32_1 = arith.constant 0 : i32
    return %c0_i32, %c0_i32_0 : i32, i32
  }
  func.func @transform_5(%arg0: i32) -> (i32, i32) {
    %c0_i32 = arith.constant 0 : i32
    %c0_i32_0 = arith.constant 0 : i32
    return %arg0, %c0_i32 : i32, i32
  }
}

</mosaic_0001>

<llo_original>
// kernel: tpu_custom_call.1
$region0: #{tpu_custom_call.1}
  #allocation0 [shape = 'u32[]', space=smem, size = 0x4, offset = 0x4, fixed_abs, tag = 'smem constant byte address 0x4 - core index']
  #allocation1 [shape = 'u32[72,128]{1,0:T(1,128)}', space=vmem, size = 0x9000, scoped, tag = 'internal scratch']
  %s0 = inlined_call_operand.hbm [shape: f32[8,1024], index: 0, kind: input, shape index: {}]
  %s1 = inlined_call_operand.hbm [shape: bf16[128,128], index: 1, kind: input, shape index: {}]
  %s2 = inlined_call_operand.vmem [shape: f32[1,128], index: 2, kind: input, shape index: {}]
  %s3 = inlined_call_operand.hbm [shape: bf16[128,128], index: 3, kind: input, shape index: {}]
  %s4 = inlined_call_operand.vmem [shape: f32[1,128], index: 4, kind: input, shape index: {}]
  %s5 = inlined_call_operand.hbm [shape: f32[8,128], index: 5, kind: output, shape index: {}]
  %s6 = sld [smem:[#allocation0]]
  $region42: #{tpu_custom_call.1} parent=0
    _
  %s8 = ssub.s32 1, %s6
  %s9 = scalar_select 0, %s8, %s6
  $region1: #{tpu_custom_call.1} parent=0
    #allocation2 [shape = 'u8[4096]{0}', space=vmem, size = 0x1000, scoped, tag = 'input window, operand 0, single buffered']
    #allocation3 [shape = 's32[1]{0}', space=sflag, size = 0x4, scoped, tag = 'scoped memory for tpu_custom_call.1']
    #allocation4 [shape = 's32[1]{0}', space=sflag, size = 0x4, scoped, tag = 'scoped memory for tpu_custom_call.1']
    #allocation5 [shape = 'u8[32768]{0}', space=vmem, size = 0x8000, scoped, tag = 'input window, operand 1, single buffered']
    #allocation6 [shape = 's32[1]{0}', space=sflag, size = 0x4, scoped, tag = 'scoped memory for tpu_custom_call.1']
    #allocation7 [shape = 'u8[32768]{0}', space=vmem, size = 0x8000, scoped, tag = 'input window, operand 3, single buffered']
    #allocation8 [shape = 'u8[4096]{0}', space=vmem, size = 0x1000, scoped, tag = 'output window, operand 0, single buffered']
    %10 = vsyncpa [#allocation3], 0
    %11 = vsyncpa [#allocation6], 0
    %12 = vsyncpa [#allocation4], 0
    // Predicated region
    $region2: #{tpu_custom_call.1} parent=1 // pred_check
      _
    $region3: #{tpu_custom_call.1} parent=1 // pred_check_branch
      %14 = sbr.rel (0) target = $region5
    $region4: #{tpu_custom_call.1} parent=1 // pred_region
      %16 = vsyncadd [#allocation3], 0
      %s18 = sshll.u32 %s0, 4
      %s19 = int_to_ptr.hbm [resolvable:$true] %s18
      %s20 = sshll.u32 [#allocation2], 4
      %s21 = int_to_ptr.vmem [resolvable:$true] %s20
      %23 = dma.hbm_to_vmem [thread:$0]  %s19, 128, %s21, [#allocation3]
    $region5: #{tpu_custom_call.1} parent=1 // pred_fallthru
      _
    // Predicated region
    $region6: #{tpu_custom_call.1} parent=1 // pred_check
      _
    $region7: #{tpu_custom_call.1} parent=1 // pred_check_branch
      %25 = sbr.rel (0) target = $region9
    $region8: #{tpu_custom_call.1} parent=1 // pred_region
      %27 = vsyncadd [#allocation6], 0
      %s28 = sshll.u32 %s1, 4
      %s29 = int_to_ptr.hbm [resolvable:$true] %s28
      %s30 = sshll.u32 [#allocation5], 4
      %s31 = int_to_ptr.vmem [resolvable:$true] %s30
      %36 = dma.hbm_to_vmem [thread:$0]  %s29, 1024, %s31, [#allocation6], 64, 64, 4
    $region9: #{tpu_custom_call.1} parent=1 // pred_fallthru
      _
    // Predicated region
    $region10: #{tpu_custom_call.1} parent=1 // pred_check
      _
    $region11: #{tpu_custom_call.1} parent=1 // pred_check_branch
      %38 = sbr.rel (0) target = $region13
    $region12: #{tpu_custom_call.1} parent=1 // pred_region
      _
    $region13: #{tpu_custom_call.1} parent=1 // pred_fallthru
      _
    // Predicated region
    $region14: #{tpu_custom_call.1} parent=1 // pred_check
      _
    $region15: #{tpu_custom_call.1} parent=1 // pred_check_branch
      %40 = sbr.rel (0) target = $region17
    $region16: #{tpu_custom_call.1} parent=1 // pred_region
      %42 = vsyncadd [#allocation6], 0
      %s43 = sshll.u32 %s3, 4
      %s44 = int_to_ptr.hbm [resolvable:$true] %s43
      %s45 = sshll.u32 [#allocation7], 4
      %s46 = int_to_ptr.vmem [resolvable:$true] %s45
      %51 = dma.hbm_to_vmem [thread:$0]  %s44, 1024, %s46, [#allocation6], 64, 64, 4
    $region17: #{tpu_custom_call.1} parent=1 // pred_fallthru
      _
    // Predicated region
    $region18: #{tpu_custom_call.1} parent=1 // pred_check
      _
    $region19: #{tpu_custom_call.1} parent=1 // pred_check_branch
      %53 = sbr.rel (0) target = $region21
    $region20: #{tpu_custom_call.1} parent=1 // pred_region
      _
    $region21: #{tpu_custom_call.1} parent=1 // pred_fallthru
      _
    // Predicated region
    $region22: #{tpu_custom_call.1} parent=1 // pred_check
      _
    $region23: #{tpu_custom_call.1} parent=1 // pred_check_branch
      %55 = sbr.rel (0) target = $region25
    $region24: #{tpu_custom_call.1} parent=1 // pred_region
      %57 = dma.done [#allocation3], 128
    $region25: #{tpu_custom_call.1} parent=1 // pred_fallthru
      _
    // Predicated region
    $region26: #{tpu_custom_call.1} parent=1 // pred_check
      _
    $region27: #{tpu_custom_call.1} parent=1 // pred_check_branch
      %59 = sbr.rel (0) target = $region29
    $region28: #{tpu_custom_call.1} parent=1 // pred_region
      %61 = dma.done [#allocation6], 1024
    $region29: #{tpu_custom_call.1} parent=1 // pred_fallthru
      _
    // Predicated region
    $region30: #{tpu_custom_call.1} parent=1 // pred_check
      _
    $region31: #{tpu_custom_call.1} parent=1 // pred_check_branch
      %63 = sbr.rel (0) target = $region33
    $region32: #{tpu_custom_call.1} parent=1 // pred_region
      %65 = dma.done [#allocation6], 1024
    $region33: #{tpu_custom_call.1} parent=1 // pred_fallthru
      _
    %v66 = vld [vmem:[#allocation5] sm:$0xf]
    %v67 = vld [vmem:[#allocation5 + $0x4] sm:$0xf]
    %v68 = vld [vmem:[#allocation5 + $0x8] sm:$0xf]
    %v69 = vld [vmem:[#allocation5 + $0xc] sm:$0xf]
    %v70 = vld [vmem:[#allocation5 + $0x10] sm:$0xf]
    %v71 = vld [vmem:[#allocation5 + $0x14] sm:$0xf]
    %v72 = vld [vmem:[#allocation5 + $0x18] sm:$0xf]
    %v73 = vld [vmem:[#allocation5 + $0x1c] sm:$0xf]
    %v74 = vld [vmem:[#allocation5 + $0x20] sm:$0xf]
    %v75 = vld [vmem:[#allocation5 + $0x24] sm:$0xf]
    %v76 = vld [vmem:[#allocation5 + $0x28] sm:$0xf]
    %v77 = vld [vmem:[#allocation5 + $0x2c] sm:$0xf]
    %v78 = vld [vmem:[#allocation5 + $0x30] sm:$0xf]
    %v79 = vld [vmem:[#allocation5 + $0x34] sm:$0xf]
    %v80 = vld [vmem:[#allocation5 + $0x38] sm:$0xf]
    %v81 = vld [vmem:[#allocation5 + $0x3c] sm:$0xf]
    %v82 = vld [vmem:[%s2] sm:$0x1]
    %v83 = vld [vmem:[#allocation7] sm:$0xf]
    %v84 = vld [vmem:[#allocation7 + $0x4] sm:$0xf]
    %v85 = vld [vmem:[#allocation7 + $0x8] sm:$0xf]
    %v86 = vld [vmem:[#allocation7 + $0xc] sm:$0xf]
    %v87 = vld [vmem:[#allocation7 + $0x10] sm:$0xf]
    %v88 = vld [vmem:[#allocation7 + $0x14] sm:$0xf]
    %v89 = vld [vmem:[#allocation7 + $0x18] sm:$0xf]
    %v90 = vld [vmem:[#allocation7 + $0x1c] sm:$0xf]
    %v91 = vld [vmem:[#allocation7 + $0x20] sm:$0xf]
    %v92 = vld [vmem:[#allocation7 + $0x24] sm:$0xf]
    %v93 = vld [vmem:[#allocation7 + $0x28] sm:$0xf]
    %v94 = vld [vmem:[#allocation7 + $0x2c] sm:$0xf]
    %v95 = vld [vmem:[#allocation7 + $0x30] sm:$0xf]
    %v96 = vld [vmem:[#allocation7 + $0x34] sm:$0xf]
    %v97 = vld [vmem:[#allocation7 + $0x38] sm:$0xf]
    %v98 = vld [vmem:[#allocation7 + $0x3c] sm:$0xf]
    %v99 = vld [vmem:[%s4] sm:$0x1]
    %v100 = vld [vmem:[#allocation2] sm:$0xff]
    %v101 = vpack.c.bf16 %v100, %v100
    %v103 = vperm.slane %v82, 0
    %v121 = vunpack.c.l.b16 %v66
    %v122 = vunpack.c.l.b16 %v67
    %v123 = vunpack.c.l.b16 %v68
    %v124 = vunpack.c.l.b16 %v69
    %v125 = vunpack.c.l.b16 %v70
    %v126 = vunpack.c.l.b16 %v71
    %v127 = vunpack.c.l.b16 %v72
    %v128 = vunpack.c.l.b16 %v73
    %v129 = vunpack.c.l.b16 %v74
    %v130 = vunpack.c.l.b16 %v75
    %v131 = vunpack.c.l.b16 %v76
    %v132 = vunpack.c.l.b16 %v77
    %v133 = vunpack.c.l.b16 %v78
    %v134 = vunpack.c.l.b16 %v79
    %v135 = vunpack.c.l.b16 %v80
    %v136 = vunpack.c.l.b16 %v81
    %v137 = vpack.c.b16 %v122, %v121
    %v138 = vpack.c.b16 %v124, %v123
    %v139 = vpack.c.b16 %v126, %v125
    %v140 = vpack.c.b16 %v128, %v127
    %v141 = vpack.c.b16 %v130, %v129
    %v142 = vpack.c.b16 %v132, %v131
    %v143 = vpack.c.b16 %v134, %v133
    %v144 = vpack.c.b16 %v136, %v135
    %153 = vmatpush.bf16.msra.mxu0 %v144
    %154 = vmatpush.bf16.msra.mxu0 %v143
    %155 = vmatpush.bf16.msra.mxu0 %v142
    %156 = vmatpush.bf16.msra.mxu0 %v141
    %157 = vmatpush.bf16.msra.mxu0 %v140
    %158 = vmatpush.bf16.msra.mxu0 %v139
    %159 = vmatpush.bf16.msra.mxu0 %v138
    %160 = vmatpush.bf16.msra.mxu0 %v137
    %161 = vmatmul.bf16.gmra.mxu0 %v101
    %v162 = vpop.f32.mrf.mxu0
    %v163 = vadd.f32 %v103, %v162
    %v164 = vpop.f32.mrf.mxu0
    %165 = vdwg.mxu0
    %v166 = vpack.c.bf16 %v163, %v163
    %v167 = vunpack.c.l.bf16 %v166
    %v168 = vtanh.pop %v167
    %v169 = vpack.c.bf16 %v168, %v168
    %v171 = vperm.slane %v99, 0
    %v189 = vunpack.c.l.b16 %v83
    %v190 = vunpack.c.l.b16 %v84
    %v191 = vunpack.c.l.b16 %v85
    %v192 = vunpack.c.l.b16 %v86
    %v193 = vunpack.c.l.b16 %v87
    %v194 = vunpack.c.l.b16 %v88
    %v195 = vunpack.c.l.b16 %v89
    %v196 = vunpack.c.l.b16 %v90
    %v197 = vunpack.c.l.b16 %v91
    %v198 = vunpack.c.l.b16 %v92
    %v199 = vunpack.c.l.b16 %v93
    %v200 = vunpack.c.l.b16 %v94
    %v201 = vunpack.c.l.b16 %v95
    %v202 = vunpack.c.l.b16 %v96
    %v203 = vunpack.c.l.b16 %v97
    %v204 = vunpack.c.l.b16 %v98
    %v205 = vpack.c.b16 %v190, %v189
    %v206 = vpack.c.b16 %v192, %v191
    %v207 = vpack.c.b16 %v194, %v193
    %v208 = vpack.c.b16 %v196, %v195
    %v209 = vpack.c.b16 %v198, %v197
    %v210 = vpack.c.b16 %v200, %v199
    %v211 = vpack.c.b16 %v202, %v201
    %v212 = vpack.c.b16 %v204, %v203
    %221 = vmatpush.bf16.msra.mxu0 %v212
    %222 = vmatpush.bf16.msra.mxu0 %v211
    %223 = vmatpush.bf16.msra.mxu0 %v210
    %224 = vmatpush.bf16.msra.mxu0 %v209
    %225 = vmatpush.bf16.msra.mxu0 %v208
    %226 = vmatpush.bf16.msra.mxu0 %v207
    %227 = vmatpush.bf16.msra.mxu0 %v206
    %228 = vmatpush.bf16.msra.mxu0 %v205
    %229 = vmatmul.bf16.gmra.mxu0 %v169
    %v230 = vpop.f32.mrf.mxu0
    %v231 = vadd.f32 %v171, %v230
    %v232 = vpop.f32.mrf.mxu0
    %233 = vdwg.mxu0
    %234 = vst [vmem:[#allocation8] sm:$0xff] %v231
    // Predicated region
    $region34: #{tpu_custom_call.1} parent=1 // pred_check
      _
    $region35: #{tpu_custom_call.1} parent=1 // pred_check_branch
      %236 = sbr.rel (0) target = $region37
    $region36: #{tpu_custom_call.1} parent=1 // pred_region
      %238 = vsyncadd [#allocation4], 0
      %s240 = sshll.u32 [#allocation8], 4
      %s241 = int_to_ptr.vmem [resolvable:$true] %s240
      %s242 = sshll.u32 %s5, 4
      %s243 = int_to_ptr.hbm [resolvable:$true] %s242
      %245 = dma.vmem_to_hbm [thread:$0]  %s241, 128, %s243, [#allocation4]
    $region37: #{tpu_custom_call.1} parent=1 // pred_fallthru
      _
    // Predicated region
    $region38: #{tpu_custom_call.1} parent=1 // pred_check
      _
    $region39: #{tpu_custom_call.1} parent=1 // pred_check_branch
      %247 = sbr.rel (0) target = $region41
    $region40: #{tpu_custom_call.1} parent=1 // pred_region
      %249 = dma.done [#allocation4], 128
    $region41: #{tpu_custom_call.1} parent=1 // pred_fallthru
      _
    %250 = vsyncpa [#allocation3], 1
    %251 = vsyncpa [#allocation6], 1
    %252 = vsyncpa [#allocation4], 1

// kernel: tpu_custom_call.1
$region0: #{tpu_custom_call.1}
  #allocation0 [shape = 'u32[]', space=smem, size = 0x4, offset = 0x4, fixed_abs, tag = 'smem constant byte address 0x4 - core index']
  #allocation1 [shape = 'u32[72,128]{1,0:T(1,128)}', space=vmem, size = 0x9000, scoped, tag = 'internal scratch']
  %s0 = inlined_call_operand.hbm [shape: f32[8,1024], index: 0, kind: input, shape index: {}]
  %s1 = inlined_call_operand.hbm [shape: bf16[128,128], index: 1, kind: input, shape index: {}]
  %s2 = inlined_call_operand.vmem [shape: f32[1,128], index: 2, kind: input, shape index: {}]
  %s3 = inlined_call_operand.hbm [shape: bf16[128,128], index: 3, kind: input, shape index: {}]
  %s4 = inlined_call_operand.vmem [shape: f32[1,128], index: 4, kind: input, shape index: {}]
  %s5 = inlined_call_operand.hbm [shape: f32[8,128], index: 5, kind: output, shape index: {}]
  %s6 = sld [smem:[#allocation0]]
  $region42: #{tpu_custom_call.1} parent=0
    _
  %s8 = ssub.s32 1, %s6
  %s9 = scalar_select 0, %s8, %s6
  $region1: #{tpu_custom_call.1} parent=0
    #allocation2 [shape = 'u8[4096]{0}', space=vmem, size = 0x1000, scoped, tag = 'input window, operand 0, single buffered']
    #allocation3 [shape = 's32[1]{0}', space=sflag, size = 0x4, scoped, tag = 'scoped memory for tpu_custom_call.1']
    #allocation4 [shape = 's32[1]{0}', space=sflag, size = 0x4, scoped, tag = 'scoped memory for tpu_custom_call.1']
    #allocation5 [shape = 'u8[32768]{0}', space=vmem, size = 0x8000, scoped, tag = 'input window, operand 1, single buffered']
    #allocation6 [shape = 's32[1]{0}', space=sflag, size = 0x4, scoped, tag = 'scoped memory for tpu_custom_call.1']
    #allocation7 [shape = 'u8[32768]{0}', space=vmem, size = 0x8000, scoped, tag = 'input window, operand 3, single buffered']
    #allocation8 [shape = 'u8[4096]{0}', space=vmem, size = 0x1000, scoped, tag = 'output window, operand 0, single buffered']
    %10 = vsyncpa [#allocation3], 0
    %11 = vsyncpa [#allocation6], 0
    %12 = vsyncpa [#allocation4], 0
    // Predicated region
    $region2: #{tpu_custom_call.1} parent=1 // pred_check
      _
    $region3: #{tpu_custom_call.1} parent=1 // pred_check_branch
      %14 = sbr.rel (0) target = $region5
    $region4: #{tpu_custom_call.1} parent=1 // pred_region
      %16 = vsyncadd [#allocation3], 0
      %s18 = sshll.u32 %s0, 4
      %s19 = int_to_ptr.hbm [resolvable:$true] %s18
      %s20 = sshll.u32 [#allocation2], 4
      %s21 = int_to_ptr.vmem [resolvable:$true] %s20
      %23 = dma.hbm_to_vmem [thread:$0]  %s19, 128, %s21, [#allocation3]
    $region5: #{tpu_custom_call.1} parent=1 // pred_fallthru
      _
    // Predicated region
    $region6: #{tpu_custom_call.1} parent=1 // pred_check
      _
    $region7: #{tpu_custom_call.1} parent=1 // pred_check_branch
      %25 = sbr.rel (0) target = $region9
    $region8: #{tpu_custom_call.1} parent=1 // pred_region
      %27 = vsyncadd [#allocation6], 0
      %s28 = sshll.u32 %s1, 4
      %s29 = int_to_ptr.hbm [resolvable:$true] %s28
      %s30 = sshll.u32 [#allocation5], 4
      %s31 = int_to_ptr.vmem [resolvable:$true] %s30
      %36 = dma.hbm_to_vmem [thread:$0]  %s29, 1024, %s31, [#allocation6], 64, 64, 4
    $region9: #{tpu_custom_call.1} parent=1 // pred_fallthru
      _
    // Predicated region
    $region10: #{tpu_custom_call.1} parent=1 // pred_check
      _
    $region11: #{tpu_custom_call.1} parent=1 // pred_check_branch
      %38 = sbr.rel (0) target = $region13
    $region12: #{tpu_custom_call.1} parent=1 // pred_region
      _
    $region13: #{tpu_custom_call.1} parent=1 // pred_fallthru
      _
    // Predicated region
    $region14: #{tpu_custom_call.1} parent=1 // pred_check
      _
    $region15: #{tpu_custom_call.1} parent=1 // pred_check_branch
      %40 = sbr.rel (0) target = $region17
    $region16: #{tpu_custom_call.1} parent=1 // pred_region
      %42 = vsyncadd [#allocation6], 0
      %s43 = sshll.u32 %s3, 4
      %s44 = int_to_ptr.hbm [resolvable:$true] %s43
      %s45 = sshll.u32 [#allocation7], 4
      %s46 = int_to_ptr.vmem [resolvable:$true] %s45
      %51 = dma.hbm_to_vmem [thread:$0]  %s44, 1024, %s46, [#allocation6], 64, 64, 4
    $region17: #{tpu_custom_call.1} parent=1 // pred_fallthru
      _
    // Predicated region
    $region18: #{tpu_custom_call.1} parent=1 // pred_check
      _
    $region19: #{tpu_custom_call.1} parent=1 // pred_check_branch
      %53 = sbr.rel (0) target = $region21
    $region20: #{tpu_custom_call.1} parent=1 // pred_region
      _
    $region21: #{tpu_custom_call.1} parent=1 // pred_fallthru
      _
    // Predicated region
    $region22: #{tpu_custom_call.1} parent=1 // pred_check
      _
    $region23: #{tpu_custom_call.1} parent=1 // pred_check_branch
      %55 = sbr.rel (0) target = $region25
    $region24: #{tpu_custom_call.1} parent=1 // pred_region
      %57 = dma.done [#allocation3], 128
    $region25: #{tpu_custom_call.1} parent=1 // pred_fallthru
      _
    // Predicated region
    $region26: #{tpu_custom_call.1} parent=1 // pred_check
      _
    $region27: #{tpu_custom_call.1} parent=1 // pred_check_branch
      %59 = sbr.rel (0) target = $region29
    $region28: #{tpu_custom_call.1} parent=1 // pred_region
      %61 = dma.done [#allocation6], 1024
    $region29: #{tpu_custom_call.1} parent=1 // pred_fallthru
      _
    // Predicated region
    $region30: #{tpu_custom_call.1} parent=1 // pred_check
      _
    $region31: #{tpu_custom_call.1} parent=1 // pred_check_branch
      %63 = sbr.rel (0) target = $region33
    $region32: #{tpu_custom_call.1} parent=1 // pred_region
      %65 = dma.done [#allocation6], 1024
    $region33: #{tpu_custom_call.1} parent=1 // pred_fallthru
      _
    %v66 = vld [vmem:[#allocation5] sm:$0xf]
    %v67 = vld [vmem:[#allocation5 + $0x4] sm:$0xf]
    %v68 = vld [vmem:[#allocation5 + $0x8] sm:$0xf]
    %v69 = vld [vmem:[#allocation5 + $0xc] sm:$0xf]
    %v70 = vld [vmem:[#allocation5 + $0x10] sm:$0xf]
    %v71 = vld [vmem:[#allocation5 + $0x14] sm:$0xf]
    %v72 = vld [vmem:[#allocation5 + $0x18] sm:$0xf]
    %v73 = vld [vmem:[#allocation5 + $0x1c] sm:$0xf]
    %v74 = vld [vmem:[#allocation5 + $0x20] sm:$0xf]
    %v75 = vld [vmem:[#allocation5 + $0x24] sm:$0xf]
    %v76 = vld [vmem:[#allocation5 + $0x28] sm:$0xf]
    %v77 = vld [vmem:[#allocation5 + $0x2c] sm:$0xf]
    %v78 = vld [vmem:[#allocation5 + $0x30] sm:$0xf]
    %v79 = vld [vmem:[#allocation5 + $0x34] sm:$0xf]
    %v80 = vld [vmem:[#allocation5 + $0x38] sm:$0xf]
    %v81 = vld [vmem:[#allocation5 + $0x3c] sm:$0xf]
    %v82 = vld [vmem:[%s2] sm:$0x1]
    %v83 = vld [vmem:[#allocation7] sm:$0xf]
    %v84 = vld [vmem:[#allocation7 + $0x4] sm:$0xf]
    %v85 = vld [vmem:[#allocation7 + $0x8] sm:$0xf]
    %v86 = vld [vmem:[#allocation7 + $0xc] sm:$0xf]
    %v87 = vld [vmem:[#allocation7 + $0x10] sm:$0xf]
    %v88 = vld [vmem:[#allocation7 + $0x14] sm:$0xf]
    %v89 = vld [vmem:[#allocation7 + $0x18] sm:$0xf]
    %v90 = vld [vmem:[#allocation7 + $0x1c] sm:$0xf]
    %v91 = vld [vmem:[#allocation7 + $0x20] sm:$0xf]
    %v92 = vld [vmem:[#allocation7 + $0x24] sm:$0xf]
    %v93 = vld [vmem:[#allocation7 + $0x28] sm:$0xf]
    %v94 = vld [vmem:[#allocation7 + $0x2c] sm:$0xf]
    %v95 = vld [vmem:[#allocation7 + $0x30] sm:$0xf]
    %v96 = vld [vmem:[#allocation7 + $0x34] sm:$0xf]
    %v97 = vld [vmem:[#allocation7 + $0x38] sm:$0xf]
    %v98 = vld [vmem:[#allocation7 + $0x3c] sm:$0xf]
    %v99 = vld [vmem:[%s4] sm:$0x1]
    %v100 = vld [vmem:[#allocation2] sm:$0xff]
    %v101 = vpack.c.bf16 %v100, %v100
    %v103 = vperm.slane %v82, 0
    %v121 = vunpack.c.l.b16 %v66
    %v122 = vunpack.c.l.b16 %v67
    %v123 = vunpack.c.l.b16 %v68
    %v124 = vunpack.c.l.b16 %v69
    %v125 = vunpack.c.l.b16 %v70
    %v126 = vunpack.c.l.b16 %v71
    %v127 = vunpack.c.l.b16 %v72
    %v128 = vunpack.c.l.b16 %v73
    %v129 = vunpack.c.l.b16 %v74
    %v130 = vunpack.c.l.b16 %v75
    %v131 = vunpack.c.l.b16 %v76
    %v132 = vunpack.c.l.b16 %v77
    %v133 = vunpack.c.l.b16 %v78
    %v134 = vunpack.c.l.b16 %v79
    %v135 = vunpack.c.l.b16 %v80
    %v136 = vunpack.c.l.b16 %v81
    %v137 = vpack.c.b16 %v122, %v121
    %v138 = vpack.c.b16 %v124, %v123
    %v139 = vpack.c.b16 %v126, %v125
    %v140 = vpack.c.b16 %v128, %v127
    %v141 = vpack.c.b16 %v130, %v129
    %v142 = vpack.c.b16 %v132, %v131
    %v143 = vpack.c.b16 %v134, %v133
    %v144 = vpack.c.b16 %v136, %v135
    %153 = vmatpush.bf16.msra.mxu0 %v144
    %154 = vmatpush.bf16.msra.mxu0 %v143
    %155 = vmatpush.bf16.msra.mxu0 %v142
    %156 = vmatpush.bf16.msra.mxu0 %v141
    %157 = vmatpush.bf16.msra.mxu0 %v140
    %158 = vmatpush.bf16.msra.mxu0 %v139
    %159 = vmatpush.bf16.msra.mxu0 %v138
    %160 = vmatpush.bf16.msra.mxu0 %v137
    %161 = vmatmul.bf16.gmra.mxu0 %v101
    %v162 = vpop.f32.mrf.mxu0
    %v163 = vadd.f32 %v103, %v162
    %v164 = vpop.f32.mrf.mxu0
    %165 = vdwg.mxu0
    %v166 = vpack.c.bf16 %v163, %v163
    %v167 = vunpack.c.l.bf16 %v166
    %v168 = vtanh.pop %v167
    %v169 = vpack.c.bf16 %v168, %v168
    %v171 = vperm.slane %v99, 0
    %v189 = vunpack.c.l.b16 %v83
    %v190 = vunpack.c.l.b16 %v84
    %v191 = vunpack.c.l.b16 %v85
    %v192 = vunpack.c.l.b16 %v86
    %v193 = vunpack.c.l.b16 %v87
    %v194 = vunpack.c.l.b16 %v88
    %v195 = vunpack.c.l.b16 %v89
    %v196 = vunpack.c.l.b16 %v90
    %v197 = vunpack.c.l.b16 %v91
    %v198 = vunpack.c.l.b16 %v92
    %v199 = vunpack.c.l.b16 %v93
    %v200 = vunpack.c.l.b16 %v94
    %v201 = vunpack.c.l.b16 %v95
    %v202 = vunpack.c.l.b16 %v96
    %v203 = vunpack.c.l.b16 %v97
    %v204 = vunpack.c.l.b16 %v98
    %v205 = vpack.c.b16 %v190, %v189
    %v206 = vpack.c.b16 %v192, %v191
    %v207 = vpack.c.b16 %v194, %v193
    %v208 = vpack.c.b16 %v196, %v195
    %v209 = vpack.c.b16 %v198, %v197
    %v210 = vpack.c.b16 %v200, %v199
    %v211 = vpack.c.b16 %v202, %v201
    %v212 = vpack.c.b16 %v204, %v203
    %221 = vmatpush.bf16.msra.mxu0 %v212
    %222 = vmatpush.bf16.msra.mxu0 %v211
    %223 = vmatpush.bf16.msra.mxu0 %v210
    %224 = vmatpush.bf16.msra.mxu0 %v209
    %225 = vmatpush.bf16.msra.mxu0 %v208
    %226 = vmatpush.bf16.msra.mxu0 %v207
    %227 = vmatpush.bf16.msra.mxu0 %v206
    %228 = vmatpush.bf16.msra.mxu0 %v205
    %229 = vmatmul.bf16.gmra.mxu0 %v169
    %v230 = vpop.f32.mrf.mxu0
    %v231 = vadd.f32 %v171, %v230
    %v232 = vpop.f32.mrf.mxu0
    %233 = vdwg.mxu0
    %234 = vst [vmem:[#allocation8] sm:$0xff] %v231
    // Predicated region
    $region34: #{tpu_custom_call.1} parent=1 // pred_check
      _
    $region35: #{tpu_custom_call.1} parent=1 // pred_check_branch
      %236 = sbr.rel (0) target = $region37
    $region36: #{tpu_custom_call.1} parent=1 // pred_region
      %238 = vsyncadd [#allocation4], 0
      %s240 = sshll.u32 [#allocation8], 4
      %s241 = int_to_ptr.vmem [resolvable:$true] %s240
      %s242 = sshll.u32 %s5, 4
      %s243 = int_to_ptr.hbm [resolvable:$true] %s242
      %245 = dma.vmem_to_hbm [thread:$0]  %s241, 128, %s243, [#allocation4]
    $region37: #{tpu_custom_call.1} parent=1 // pred_fallthru
      _
    // Predicated region
    $region38: #{tpu_custom_call.1} parent=1 // pred_check
      _
    $region39: #{tpu_custom_call.1} parent=1 // pred_check_branch
      %247 = sbr.rel (0) target = $region41
    $region40: #{tpu_custom_call.1} parent=1 // pred_region
      %249 = dma.done [#allocation4], 128
    $region41: #{tpu_custom_call.1} parent=1 // pred_fallthru
      _
    %250 = vsyncpa [#allocation3], 1
    %251 = vsyncpa [#allocation6], 1
    %252 = vsyncpa [#allocation4], 1

</llo_original>
